<compile_context>
chip_gen: v7x
topology: tpu7x:2x2x1
jax: 0.10.0
libtpu: 0.0.40
codegen_flags: <defaults>
</compile_context>

<pallas_src>
import functools

import jax
import jax.numpy as jnp
from jax import lax
from jax.experimental import pallas as pl
from jax.experimental.pallas import tpu as pltpu


def _round_up(a, b):
    return -(-a // b) * b


def _pick_strip(sub_tile, target=512):
    """Largest multiple of 8 <= target that divides sub_tile (sub_tile % 8 == 0)."""
    s = min(sub_tile, target)
    s -= s % 8
    while sub_tile % s:
        s -= 8
    return s


def _focal_loss_kernel(neg_alpha_ref, preds_ref, labels_ref, out_ref, *,
                       gamma, num_classes, strip, n_strips):
    lane = labels_ref.shape[-1]

    def strip_body(si, acc):
        off = pl.multiple_of(si * strip, 8)
        lab = labels_ref[pl.ds(off, strip), :]                      # (strip, 128) i32

        # Unrolled per-class loads (C is tiny and static): lane-dense strips.
        xs = [preds_ref[c, pl.ds(off, strip), :].astype(jnp.float32)
              for c in range(num_classes)]

        # Row-wise max over classes (pure VPU, no cross-lane reduce).
        m = xs[0]
        for c in range(1, num_classes):
            m = jnp.maximum(m, xs[c])

        # Softmax denominator + label-class selects, unrolled over static C.
        s_exp = jnp.zeros_like(m)
        e_t = jnp.zeros_like(m)
        x_t = jnp.zeros_like(m)
        a_t = jnp.zeros_like(m)
        for c in range(num_classes):
            e_c = jnp.exp(xs[c] - m)
            s_exp = s_exp + e_c
            sel = lab == c
            e_t = jnp.where(sel, e_c, e_t)
            x_t = jnp.where(sel, xs[c], x_t)
            a_t = jnp.where(sel, neg_alpha_ref[c], a_t)             # SMEM scalar

        # log-softmax / softmax evaluated only at the label class.
        logp_t = (x_t - m) - jnp.log(s_exp)
        # approx=True is accurate enough once the kernel is VALU-bound (bf16
        # inputs); kept exact here to match the reference to 1e-5.
        p_t = e_t * pl.reciprocal(s_exp, approx=False)
        one_minus_p = 1.0 - p_t

        if isinstance(gamma, int) and gamma >= 0:
            if gamma == 0:
                focal = jnp.ones_like(one_minus_p)
            else:
                focal = one_minus_p
                for _ in range(gamma - 1):                           # gamma==2 -> 1 mul
                    focal = focal * one_minus_p
        else:
            # Clamp: p_t can exceed 1.0 by an ulp -> negative base -> NaN power.
            focal = jnp.power(jnp.maximum(one_minus_p, 0.0), jnp.float32(gamma))

        # Padded rows carry label -1 -> a_t == 0 -> zero contribution.
        loss = a_t * focal * logp_t                                  # alpha pre-negated

        # Fold (strip,128) -> (8,128) with static vreg adds (cheap, VPU only).
        part = loss[0:8, :]
        for j in range(1, strip // 8):
            part = part + loss[j * 8:(j + 1) * 8, :]
        return acc + part

    acc = lax.fori_loop(0, n_strips, strip_body,
                        jnp.zeros((8, lane), jnp.float32),
                        unroll=(n_strips <= 4))
    out_ref[...] = acc                                               # (8,128) partial


def focal_loss(preds, labels, alpha_vec, *, gamma=2, size_average=True,
               rows_per_tile=262144, strip_target=512):
    """preds: (..., C) float, labels: (...) int, alpha_vec: (C,) float."""
    num_classes = preds.shape[-1]
    preds2d = preds.reshape(-1, num_classes)            # keep native dtype in HBM
    labels1d = labels.reshape(-1).astype(jnp.int32)
    n = preds2d.shape[0]

    lane = 128
    min_tile = 8 * lane                                  # 1024 rows = (8,128) tile

    # Split rows into nearly equal, 1024-row-aligned tiles so tail padding is
    # bounded (instead of up to one whole 256K-row tile of wasted DMA).
    n_pad1 = _round_up(n, min_tile)
    tile_rows = min(_round_up(max(rows_per_tile, min_tile), min_tile), n_pad1)
    num_tiles = pl.cdiv(n_pad1, tile_rows)
    tile_rows = _round_up(pl.cdiv(n_pad1, num_tiles), min_tile)
    n_pad = num_tiles * tile_rows
    sub_tile = tile_rows // lane
    strip = _pick_strip(sub_tile, strip_target)
    n_strips = sub_tile // strip

    # Pad tail, then go lane-dense: preds (C, n_pad/128, 128), labels (n_pad/128, 128).
    preds_pad = jnp.pad(preds2d, ((0, n_pad - n), (0, 0)))
    labels_pad = jnp.pad(labels1d, (0, n_pad - n), constant_values=-1)
    preds_t = preds_pad.T.reshape(num_classes, n_pad // lane, lane)
    labels_t = labels_pad.reshape(n_pad // lane, lane)
    neg_alpha = (-alpha_vec.reshape(-1)).astype(jnp.float32)   # (C,) -> SMEM prefetch

    kernel = functools.partial(
        _focal_loss_kernel, gamma=gamma, num_classes=num_classes,
        strip=strip, n_strips=n_strips)

    itemsize = jnp.dtype(preds_t.dtype).itemsize
    step_in_bytes = tile_rows * (num_classes * itemsize + 4)
    # Double-buffered inputs + tiny partial outputs + headroom for the strip
    # working set.  Explicit so v5e's 16 MiB scoped default does not bite and
    # large tiles are actually usable; clamped below v7x's 64 MiB physical VMEM.
    vmem_limit = int(min(max(2 * (step_in_bytes + 8 * lane * 4) + (12 << 20),
                             24 << 20), 56 << 20))

    cost = pl.CostEstimate(
        flops=int((5 * num_classes + 12) * n_pad),
        transcendentals=int((num_classes + 2) * n_pad),
        bytes_accessed=int(preds_t.size * itemsize + labels_t.size * 4
                           + num_tiles * 8 * lane * 4 + num_classes * 4))

    partials = pl.pallas_call(
        kernel,
        out_shape=jax.ShapeDtypeStruct((num_tiles * 8, lane), jnp.float32),
        grid_spec=pltpu.PrefetchScalarGridSpec(
            num_scalar_prefetch=1,
            grid=(num_tiles,),
            in_specs=[
                pl.BlockSpec((num_classes, sub_tile, lane),
                             lambda i, alpha_ref: (0, i, 0)),
                pl.BlockSpec((sub_tile, lane),
                             lambda i, alpha_ref: (i, 0)),
            ],
            out_specs=pl.BlockSpec((8, lane), lambda i, alpha_ref: (i, 0)),
        ),
        compiler_params=pltpu.CompilerParams(
            dimension_semantics=("parallel",),
            vmem_limit_bytes=vmem_limit),
        cost_estimate=cost,
    )(neg_alpha, preds_t, labels_t)

    total = jnp.sum(partials)
    if size_average:
        total = total / jnp.float32(n)
    return total


def _reference_focal_loss(preds, labels, alpha_vec, gamma=2, size_average=True):
    preds2d = preds.reshape(-1, preds.shape[-1]).astype(jnp.float32)
    lab = labels.reshape(-1)
    p = jax.nn.softmax(preds2d, axis=1)
    logp = jnp.log(p)
    p_t = jnp.take_along_axis(p, lab[:, None], axis=1)[:, 0]
    logp_t = jnp.take_along_axis(logp, lab[:, None], axis=1)[:, 0]
    alpha_t = alpha_vec[lab]
    loss = -alpha_t * jnp.power(1.0 - p_t, gamma) * logp_t
    return jnp.mean(loss) if size_average else jnp.sum(loss)


if __name__ == "__main__":
    num_classes = 3
    alpha_scalar = 0.25
    gamma = 2

    # alpha initialized as in the module: alpha[0]=0.25, alpha[1:]=0.75
    alpha_vec = jnp.concatenate([
        jnp.array([alpha_scalar], dtype=jnp.float32),
        jnp.full((num_classes - 1,), 1.0 - alpha_scalar, dtype=jnp.float32),
    ])

    key = jax.random.PRNGKey(0)
    kp, kl = jax.random.split(key)
    # small shapes: preds (2, 32, 3) -> flattened to (64, 3); labels (2, 32)
    preds = jax.random.normal(kp, (2, 32, num_classes), dtype=jnp.float32)
    labels = jax.random.randint(kl, (2, 32), 0, num_classes, dtype=jnp.int32)

    out = focal_loss(preds, labels, alpha_vec, gamma=gamma, size_average=True)
    out = jax.block_until_ready(out)

    ref = _reference_focal_loss(preds, labels, alpha_vec, gamma=gamma,
                                size_average=True)
    assert jnp.allclose(out, ref, rtol=1e-5, atol=1e-5), (out, ref)
    print("KERNEL_OK")
</pallas_src>

<mosaic_0001>
module attributes {stable_mosaic.version = 11 : i64} {
  func.func @_focal_loss_kernel(%arg0: i32, %arg1: memref<3xf32, #tpu.memory_space<smem>>, %arg2: memref<3x8x128xf32, #tpu.memory_space<vmem>>, %arg3: memref<8x128xi32, #tpu.memory_space<vmem>>, %arg4: memref<8x128xf32, #tpu.memory_space<vmem>>) attributes {dimension_semantics = [#tpu.dimension_semantics<parallel>], iteration_bounds = array<i64: 1>, scalar_prefetch = 1 : i64, scratch_operands = 0 : i64, tpu.core_type = #tpu.core_type<tc>, window_params = [{transform_indices = @transform_0, window_bounds = array<i64: 3, 8, 128>}, {transform_indices = @transform_1, window_bounds = array<i64: 8, 128>}, {transform_indices = @transform_2, window_bounds = array<i64: 8, 128>}]} {
    %cst = arith.constant 0.000000e+00 : f32
    %0 = vector.broadcast %cst : f32 to vector<8x128xf32>
    %c0_i32 = arith.constant 0 : i32
    %c8_i32 = arith.constant 8 : i32
    %1 = arith.muli %c0_i32, %c8_i32 : i32
    %2 = tpu.assume_multiple %1, 8 : i32
    %3 = arith.index_cast %2 : i32 to index
    %c0 = arith.constant 0 : index
    %4 = vector.load %arg3[%3, %c0] : memref<8x128xi32, #tpu.memory_space<vmem>>, vector<8x128xi32>
    %c0_0 = arith.constant 0 : index
    %5 = arith.index_cast %2 : i32 to index
    %c0_1 = arith.constant 0 : index
    %6 = vector.load %arg2[%c0_0, %5, %c0_1] : memref<3x8x128xf32, #tpu.memory_space<vmem>>, vector<1x8x128xf32>
    %7 = vector.shape_cast %6 : vector<1x8x128xf32> to vector<8x128xf32>
    %c1 = arith.constant 1 : index
    %8 = arith.index_cast %2 : i32 to index
    %c0_2 = arith.constant 0 : index
    %9 = vector.load %arg2[%c1, %8, %c0_2] : memref<3x8x128xf32, #tpu.memory_space<vmem>>, vector<1x8x128xf32>
    %10 = vector.shape_cast %9 : vector<1x8x128xf32> to vector<8x128xf32>
    %c2 = arith.constant 2 : index
    %11 = arith.index_cast %2 : i32 to index
    %c0_3 = arith.constant 0 : index
    %12 = vector.load %arg2[%c2, %11, %c0_3] : memref<3x8x128xf32, #tpu.memory_space<vmem>>, vector<1x8x128xf32>
    %13 = vector.shape_cast %12 : vector<1x8x128xf32> to vector<8x128xf32>
    %14 = arith.maximumf %7, %10 : vector<8x128xf32>
    %15 = arith.maximumf %14, %13 : vector<8x128xf32>
    %cst_4 = arith.constant 0.000000e+00 : f32
    %16 = vector.broadcast %cst_4 : f32 to vector<8x128xf32>
    %cst_5 = arith.constant 0.000000e+00 : f32
    %17 = vector.broadcast %cst_5 : f32 to vector<8x128xf32>
    %cst_6 = arith.constant 0.000000e+00 : f32
    %18 = vector.broadcast %cst_6 : f32 to vector<8x128xf32>
    %cst_7 = arith.constant 0.000000e+00 : f32
    %19 = vector.broadcast %cst_7 : f32 to vector<8x128xf32>
    %20 = arith.subf %7, %15 : vector<8x128xf32>
    %21 = math.exp %20 : vector<8x128xf32>
    %22 = arith.addf %16, %21 : vector<8x128xf32>
    %c0_i32_8 = arith.constant 0 : i32
    %23 = vector.broadcast %c0_i32_8 : i32 to vector<8x128xi32>
    %24 = arith.cmpi eq, %4, %23 : vector<8x128xi32>
    %25 = arith.select %24, %21, %17 : vector<8x128xi1>, vector<8x128xf32>
    %26 = arith.select %24, %7, %18 : vector<8x128xi1>, vector<8x128xf32>
    %c0_9 = arith.constant 0 : index
    %27 = memref.load %arg1[%c0_9] : memref<3xf32, #tpu.memory_space<smem>>
    %28 = vector.broadcast %27 : f32 to vector<8x128xf32>
    %29 = arith.select %24, %28, %19 : vector<8x128xi1>, vector<8x128xf32>
    %30 = arith.subf %10, %15 : vector<8x128xf32>
    %31 = math.exp %30 : vector<8x128xf32>
    %32 = arith.addf %22, %31 : vector<8x128xf32>
    %c1_i32 = arith.constant 1 : i32
    %33 = vector.broadcast %c1_i32 : i32 to vector<8x128xi32>
    %34 = arith.cmpi eq, %4, %33 : vector<8x128xi32>
    %35 = arith.select %34, %31, %25 : vector<8x128xi1>, vector<8x128xf32>
    %36 = arith.select %34, %10, %26 : vector<8x128xi1>, vector<8x128xf32>
    %c1_10 = arith.constant 1 : index
    %37 = memref.load %arg1[%c1_10] : memref<3xf32, #tpu.memory_space<smem>>
    %38 = vector.broadcast %37 : f32 to vector<8x128xf32>
    %39 = arith.select %34, %38, %29 : vector<8x128xi1>, vector<8x128xf32>
    %40 = arith.subf %13, %15 : vector<8x128xf32>
    %41 = math.exp %40 : vector<8x128xf32>
    %42 = arith.addf %32, %41 : vector<8x128xf32>
    %c2_i32 = arith.constant 2 : i32
    %43 = vector.broadcast %c2_i32 : i32 to vector<8x128xi32>
    %44 = arith.cmpi eq, %4, %43 : vector<8x128xi32>
    %45 = arith.select %44, %41, %35 : vector<8x128xi1>, vector<8x128xf32>
    %46 = arith.select %44, %13, %36 : vector<8x128xi1>, vector<8x128xf32>
    %c2_11 = arith.constant 2 : index
    %47 = memref.load %arg1[%c2_11] : memref<3xf32, #tpu.memory_space<smem>>
    %48 = vector.broadcast %47 : f32 to vector<8x128xf32>
    %49 = arith.select %44, %48, %39 : vector<8x128xi1>, vector<8x128xf32>
    %50 = arith.subf %46, %15 : vector<8x128xf32>
    %51 = math.log %42 : vector<8x128xf32>
    %52 = arith.subf %50, %51 : vector<8x128xf32>
    %53 = tpu.reciprocal %42 : vector<8x128xf32> -> vector<8x128xf32>
    %54 = arith.mulf %45, %53 : vector<8x128xf32>
    %cst_12 = arith.constant 1.000000e+00 : f32
    %55 = vector.broadcast %cst_12 : f32 to vector<8x128xf32>
    %56 = arith.subf %55, %54 : vector<8x128xf32>
    %57 = arith.mulf %56, %56 : vector<8x128xf32>
    %58 = arith.mulf %49, %57 : vector<8x128xf32>
    %59 = arith.mulf %58, %52 : vector<8x128xf32>
    %60 = arith.addf %0, %59 : vector<8x128xf32>
    %c1_i32_13 = arith.constant 1 : i32
    %c0_14 = arith.constant 0 : index
    %c0_15 = arith.constant 0 : index
    %61 = vector.load %arg4[%c0_14, %c0_15] : memref<8x128xf32, #tpu.memory_space<vmem>>, vector<8x128xf32>
    tpu.vector_store %arg4[%c0_14, %c0_15], %60 {strides = array<i32>} : memref<8x128xf32, #tpu.memory_space<vmem>>, vector<8x128xf32>,
    return
  }
  func.func @transform_0(%arg0: i32, %arg1: memref<3xf32, #tpu.memory_space<smem>>) -> (i32, i32, i32) {
    %c0_i32 = arith.constant 0 : i32
    %c0_i32_0 = arith.constant 0 : i32
    %c0_i32_1 = arith.constant 0 : i32
    return %c0_i32, %arg0, %c0_i32_0 : i32, i32, i32
  }
  func.func @transform_1(%arg0: i32, %arg1: memref<3xf32, #tpu.memory_space<smem>>) -> (i32, i32) {
    %c0_i32 = arith.constant 0 : i32
    %c0_i32_0 = arith.constant 0 : i32
    return %arg0, %c0_i32 : i32, i32
  }
  func.func @transform_2(%arg0: i32, %arg1: memref<3xf32, #tpu.memory_space<smem>>) -> (i32, i32) {
    %c0_i32 = arith.constant 0 : i32
    %c0_i32_0 = arith.constant 0 : i32
    return %arg0, %c0_i32 : i32, i32
  }
}

</mosaic_0001>

<llo_original>
// kernel: tpu_custom_call.1
$region0: #{tpu_custom_call.1}
  #allocation0 [shape = 'u32[]', space=smem, size = 0x4, offset = 0x4, fixed_abs, tag = 'smem constant byte address 0x4 - core index']
  #allocation1 [shape = 'u32[144,128]{1,0:T(1,128)}', space=vmem, size = 0x12000, scoped, tag = 'internal scratch']
  #allocation2 [shape = 's32[1]{0}', space=sflag, size = 0x4, scoped, tag = 'scoped memory for tpu_custom_call.1']
  #allocation3 [shape = 'u8[512]{0}', space=smem, size = 0x200, scoped, tag = 'prefetched SMEM operand 0']
  %s0 = inlined_call_operand.hbm [shape: f32[3], index: 0, kind: input, shape index: {}]
  %s1 = inlined_call_operand.hbm [shape: f32[3,8,128], index: 1, kind: input, shape index: {}]
  %s2 = inlined_call_operand.hbm [shape: s32[8,128], index: 2, kind: input, shape index: {}]
  %s3 = inlined_call_operand.hbm [shape: f32[8,128], index: 3, kind: output, shape index: {}]
  %s4 = sld [smem:[#allocation0]]
  $region26: #{tpu_custom_call.1} parent=0
    _
  %s6 = ssub.s32 1, %s4
  %s7 = scalar_select 0, %s6, %s4
  %9 = dma.hbm_to_smem %s0, 16, [#allocation3], [#allocation2]
  %10 = dma.done [#allocation2], 16
  %11 = sfence
  $region1: #{tpu_custom_call.1} parent=0
    #allocation4 [shape = 'u8[12288]{0}', space=vmem, size = 0x3000, scoped, tag = 'input window, operand 1, single buffered']
    #allocation5 [shape = 's32[1]{0}', space=sflag, size = 0x4, scoped, tag = 'scoped memory for tpu_custom_call.1']
    #allocation6 [shape = 's32[1]{0}', space=sflag, size = 0x4, scoped, tag = 'scoped memory for tpu_custom_call.1']
    #allocation7 [shape = 'u8[4096]{0}', space=vmem, size = 0x1000, scoped, tag = 'input window, operand 2, single buffered']
    #allocation8 [shape = 's32[1]{0}', space=sflag, size = 0x4, scoped, tag = 'scoped memory for tpu_custom_call.1']
    #allocation9 [shape = 'u8[4096]{0}', space=vmem, size = 0x1000, scoped, tag = 'output window, operand 0, single buffered']
    %12 = vsyncpa [#allocation5], 0
    %13 = vsyncpa [#allocation8], 0
    %14 = vsyncpa [#allocation6], 0
    // Predicated region
    $region2: #{tpu_custom_call.1} parent=1 // pred_check
      _
    $region3: #{tpu_custom_call.1} parent=1 // pred_check_branch
      %16 = sbr.rel (0) target = $region5
    $region4: #{tpu_custom_call.1} parent=1 // pred_region
      %s18 = ssub.s32 384, 384
      %19 = vsyncadd [#allocation5], %s18
      %s20 = sshll.u32 [#allocation4], 4
      %s21 = int_to_ptr.vmem [resolvable:$true] %s20
      %26 = dma.hbm_to_vmem [thread:$0]  %s1, 384, %s21, [#allocation5], 128, 128, 8
    $region5: #{tpu_custom_call.1} parent=1 // pred_fallthru
      _
    // Predicated region
    $region6: #{tpu_custom_call.1} parent=1 // pred_check
      _
    $region7: #{tpu_custom_call.1} parent=1 // pred_check_branch
      %28 = sbr.rel (0) target = $region9
    $region8: #{tpu_custom_call.1} parent=1 // pred_region
      %s30 = ssub.s32 128, 128
      %31 = vsyncadd [#allocation8], %s30
      %s33 = sshll.u32 [#allocation7], 4
      %s34 = int_to_ptr.vmem [resolvable:$true] %s33
      %36 = dma.hbm_to_vmem [thread:$0]  %s2, 128, %s34, [#allocation8]
    $region9: #{tpu_custom_call.1} parent=1 // pred_fallthru
      _
    // Predicated region
    $region10: #{tpu_custom_call.1} parent=1 // pred_check
      _
    $region11: #{tpu_custom_call.1} parent=1 // pred_check_branch
      %38 = sbr.rel (0) target = $region13
    $region12: #{tpu_custom_call.1} parent=1 // pred_region
      %39 = dma.done [#allocation5], 384
    $region13: #{tpu_custom_call.1} parent=1 // pred_fallthru
      _
    // Predicated region
    $region14: #{tpu_custom_call.1} parent=1 // pred_check
      _
    $region15: #{tpu_custom_call.1} parent=1 // pred_check_branch
      %41 = sbr.rel (0) target = $region17
    $region16: #{tpu_custom_call.1} parent=1 // pred_region
      %42 = dma.done [#allocation8], 128
    $region17: #{tpu_custom_call.1} parent=1 // pred_fallthru
      _
    %v43 = vld [vmem:[#allocation7] sm:$0xff]
    %v44 = vld [vmem:[#allocation4] sm:$0xff]
    %s45 = sadd.s32 0, 8
    %s46 = scalar_lea.vmem [#allocation4], %s45
    %v47 = vld [vmem:[%s46] sm:$0xff]
    %s48 = sadd.s32 0, 16
    %s49 = scalar_lea.vmem [#allocation4], %s48
    %v50 = vld [vmem:[%s49] sm:$0xff]
    %v51 = vmax.f32 %v44, %v47
    %v52 = vmax.f32 %v51, %v50
    %v53 = vsub.f32 %v44, %v52
    %v54 = vmul.f32 %v53, 1.442695
    %v55 = vpow.pop %v54
    %v56 = vadd.f32 %v55, 0.0
    %vm57 = vcmp.eq.s32.totalorder %v43, 0
    %v58 = vsel %vm57, %v55, 0.0
    %v59 = vsel %vm57, %v44, 0.0
    %s60 = sld [smem:[#allocation3]]
    %v61 = vstv %s60
    %v62 = vsel %vm57, %v61, 0.0
    %v63 = vsub.f32 %v47, %v52
    %v64 = vmul.f32 %v63, 1.442695
    %v65 = vpow.pop %v64
    %v66 = vadd.f32 %v56, %v65
    %vm67 = vcmp.eq.s32.totalorder %v43, 1
    %v68 = vsel %vm67, %v65, %v58
    %v69 = vsel %vm67, %v47, %v59
    %s70 = sld [smem:[#allocation3 + $0x1]]
    %v71 = vstv %s70
    %v72 = vsel %vm67, %v71, %v62
    %v73 = vsub.f32 %v50, %v52
    %v74 = vmul.f32 %v73, 1.442695
    %v75 = vpow.pop %v74
    %v76 = vadd.f32 %v66, %v75
    %vm77 = vcmp.eq.s32.totalorder %v43, 2
    %v78 = vsel %vm77, %v75, %v68
    %v79 = vsel %vm77, %v50, %v69
    %s80 = sld [smem:[#allocation3 + $0x2]]
    %v81 = vstv %s80
    %v82 = vsel %vm77, %v81, %v72
    %v83 = vsub.f32 %v79, %v52
    %v84 = vlog2.pop %v76
    %v85 = vmul.f32 %v84, 0.6931472
    %v86 = vsub.f32 %v83, %v85
    %v87 = vrcp.pop %v76
    %v88 = vmul.f32 %v78, %v87
    %v89 = vsub.f32 1.0, %v88
    %v90 = vmul.f32 %v89, %v89
    %v91 = vmul.f32 %v82, %v90
    %v92 = vmul.f32 %v91, %v86
    %v93 = vadd.f32 %v92, 0.0
    %94 = vst [vmem:[#allocation9] sm:$0xff] %v93
    // Predicated region
    $region18: #{tpu_custom_call.1} parent=1 // pred_check
      _
    $region19: #{tpu_custom_call.1} parent=1 // pred_check_branch
      %96 = sbr.rel (0) target = $region21
    $region20: #{tpu_custom_call.1} parent=1 // pred_region
      %s98 = ssub.s32 128, 128
      %99 = vsyncadd [#allocation6], %s98
      %s101 = sshll.u32 [#allocation9], 4
      %s102 = int_to_ptr.vmem [resolvable:$true] %s101
      %104 = dma.vmem_to_hbm [thread:$0]  %s102, 128, %s3, [#allocation6]
    $region21: #{tpu_custom_call.1} parent=1 // pred_fallthru
      _
    // Predicated region
    $region22: #{tpu_custom_call.1} parent=1 // pred_check
      _
    $region23: #{tpu_custom_call.1} parent=1 // pred_check_branch
      %106 = sbr.rel (0) target = $region25
    $region24: #{tpu_custom_call.1} parent=1 // pred_region
      %107 = dma.done [#allocation6], 128
    $region25: #{tpu_custom_call.1} parent=1 // pred_fallthru
      _
    %108 = vsyncpa [#allocation5], 1
    %109 = vsyncpa [#allocation8], 1
    %110 = vsyncpa [#allocation6], 1

</llo_original>
